<compile_context>
chip_gen: v6e
topology: v6e:2x2x1
jax: 0.10.0
libtpu: 0.0.40
codegen_flags: <defaults>
</compile_context>

<pallas_src>
import functools

import jax
import jax.numpy as jnp
from jax.experimental import pallas as pl
from jax.experimental.pallas import tpu as pltpu

LANE = 128     # lane (last-dim) tile
SUBLANE = 8    # sublane (second-to-last dim) tile


def _round_up(n, m):
    return ((n + m - 1) // m) * m


def _pad2d(a, rows, cols):
    return jnp.pad(a, ((0, rows - a.shape[0]), (0, cols - a.shape[1])))


# -----------------------------------------------------------------------------
# Kernel: relu(relu(relu(x@W1+b1)@W2+b2)@W3+b3) on one batch tile.
# -----------------------------------------------------------------------------
def mlp_kernel(x_ref, w1_ref, b1_ref, w2_ref, b2_ref, w3_ref, b3_ref, o_ref):
    # f32 -> bf16 cast happens here (in VMEM/VPU), not in a wrapper HBM pass.
    x = x_ref[...].astype(jnp.bfloat16)
    # layer1: bf16 MXU matmul, f32 accumulate, f32 bias + ReLU epilogue.
    h = jnp.dot(x, w1_ref[...], preferred_element_type=jnp.float32)
    h = jnp.maximum(h + b1_ref[...], 0.0)
    # layer2
    h = jnp.dot(h.astype(jnp.bfloat16), w2_ref[...],
                preferred_element_type=jnp.float32)
    h = jnp.maximum(h + b2_ref[...], 0.0)
    # layer3 (the PyTorch module applies ReLU on the output layer too).
    h = jnp.dot(h.astype(jnp.bfloat16), w3_ref[...],
                preferred_element_type=jnp.float32)
    o_ref[...] = jnp.maximum(h + b3_ref[...], 0.0).astype(o_ref.dtype)


# -----------------------------------------------------------------------------
# One-time parameter packing (do NOT redo per forward call).
# -----------------------------------------------------------------------------
def pack_params(params):
    """Transpose to (in, out), zero-pad hidden/output feature dims to multiples
    of 128 lanes, cast matmul operands to bf16 (biases stay f32).

    The layer-1 contraction dim (in_dim) is deliberately left unpadded: the
    x / w1 blocks use the full array dim (always a legal block shape) so the
    small in_dim does not inflate x HBM traffic. Zero padding elsewhere is
    exact: padded cols produce relu(0+0)=0 which feeds zero weight rows of the
    next layer.
    """
    w1, b1 = params["w1"], params["b1"]
    w2, b2 = params["w2"], params["b2"]
    w3, b3 = params["w3"], params["b3"]
    in_dim, h1 = w1.shape[1], w1.shape[0]
    h2, out_dim = w2.shape[0], w3.shape[0]
    h1_p, h2_p, out_p = (_round_up(d, LANE) for d in (h1, h2, out_dim))
    return {
        "w1": _pad2d(w1.T, in_dim, h1_p).astype(jnp.bfloat16),
        "b1": _pad2d(b1[None, :], 1, h1_p).astype(jnp.float32),
        "w2": _pad2d(w2.T, h1_p, h2_p).astype(jnp.bfloat16),
        "b2": _pad2d(b2[None, :], 1, h2_p).astype(jnp.float32),
        "w3": _pad2d(w3.T, h2_p, out_p).astype(jnp.bfloat16),
        "b3": _pad2d(b3[None, :], 1, out_p).astype(jnp.float32),
        "dims": (in_dim, h1, h2, out_dim),
    }


# -----------------------------------------------------------------------------
# VMEM budgeting
# -----------------------------------------------------------------------------
def _vmem_budget_bytes():
    """Per-core VMEM budget, leaving headroom for compiler scratch/spill."""
    capacity = None
    if hasattr(pltpu, "get_tpu_info"):
        try:
            capacity = getattr(pltpu.get_tpu_info(), "vmem_capacity_bytes", None)
        except Exception:
            capacity = None  # query unavailable -> assume the smallest VMEM
    if capacity is None or capacity <= 64 * 2**20:
        return 48 * 2**20   # v7x: 64 MiB/core -> keep ~16 MiB headroom
    return 100 * 2**20      # v5e/v6e: 128 MiB -> let block_b grow (1024+ rows)


def _footprint_bytes(bb, in_dim, h1_p, h2_p, out_p, out_bytes):
    """Conservative per-step VMEM footprint for a batch tile of bb rows."""
    x_tiles = 2 * bb * in_dim * 4                       # double-buffered f32 x tile
    o_tiles = 2 * bb * out_p * out_bytes                # double-buffered out tile
    weights = 2 * (2 * (in_dim * h1_p + h1_p * h2_p + h2_p * out_p)   # bf16 (2 bufs)
                   + 4 * (h1_p + h2_p + out_p))                        # f32 biases
    acts = bb * (h1_p + h2_p) * 4 + bb * max(h1_p, h2_p) * 2          # live f32 + bf16 copy
    return x_tiles + o_tiles + weights + acts


# -----------------------------------------------------------------------------
# Forward wrapper
# -----------------------------------------------------------------------------
def mlp_forward(x, packed, *, block_b=None, out_dtype=jnp.float32,
                trim_output=True):
    """Fused 3-layer MLP (Linear+ReLU x3) as a single Pallas TPU kernel.

    x:      (B, in_dim) float32
    packed: output of pack_params() (pre-transposed / padded / bf16 weights).
    Returns (B, out_dim) `out_dtype` (bf16 output halves HBM writeback).
    """
    B, in_dim = x.shape
    in_d, h1, h2, out_dim = packed["dims"]
    assert in_dim == in_d, (in_dim, in_d)

    w1, b1 = packed["w1"], packed["b1"]
    w2, b2 = packed["w2"], packed["b2"]
    w3, b3 = packed["w3"], packed["b3"]
    h1_p, h2_p, out_p = w1.shape[1], w2.shape[1], w3.shape[1]
    out_bytes = jnp.dtype(out_dtype).itemsize

    vmem_cap = _vmem_budget_bytes()
    fp = functools.partial(_footprint_bytes, in_dim=in_dim, h1_p=h1_p,
                           h2_p=h2_p, out_p=out_p, out_bytes=out_bytes)

    b8 = _round_up(B, SUBLANE)
    if block_b is None:
        if fp(b8) <= vmem_cap:
            # Whole problem fits the budget: single grid step, no batch pad,
            # no per-step overhead (block == full array dim is always legal).
            block_b = B
        else:
            block_b = SUBLANE
            for cand in (1024, 512, 384, 256, 128, 64, 32, 16, 8):
                if cand <= b8 and fp(cand) <= vmem_cap:
                    block_b = cand
                    break
    else:
        # Clamp an explicit block_b so the batch is never over-padded.
        block_b = max(SUBLANE, _round_up(min(block_b, b8), SUBLANE))

    b_pad = B if block_b == B else _round_up(B, block_b)
    x_in = x if b_pad == B else jnp.pad(x, ((0, b_pad - B), (0, 0)))
    grid = (b_pad // block_b,)

    # Budget-derived limit (2x the footprint for pipeline slack), capped per
    # generation so it also fits v7x's 64 MiB per-core VMEM.
    vmem_limit = int(min(vmem_cap, max(2 * fp(block_b), 16 * 2**20)))

    out = pl.pallas_call(
        mlp_kernel,
        out_shape=jax.ShapeDtypeStruct((b_pad, out_p), out_dtype),
        grid_spec=pltpu.PrefetchScalarGridSpec(
            num_scalar_prefetch=0,
            grid=grid,
            in_specs=[
                pl.BlockSpec((block_b, in_dim), lambda i: (i, 0)),
                # Weights/biases: constant block index -> fetched once and
                # kept VMEM-resident across the grid. (For very large hidden
                # dims, pipeline_mode=pl.Buffered(1) would halve their VMEM
                # reservation; unnecessary at these sizes.)
                pl.BlockSpec((in_dim, h1_p), lambda i: (0, 0)),
                pl.BlockSpec((1, h1_p), lambda i: (0, 0)),
                pl.BlockSpec((h1_p, h2_p), lambda i: (0, 0)),
                pl.BlockSpec((1, h2_p), lambda i: (0, 0)),
                pl.BlockSpec((h2_p, out_p), lambda i: (0, 0)),
                pl.BlockSpec((1, out_p), lambda i: (0, 0)),
            ],
            out_specs=pl.BlockSpec((block_b, out_p), lambda i: (i, 0)),
        ),
        compiler_params=pltpu.CompilerParams(
            # TODO(synk): on v7x, evaluate pltpu.CORE_PARALLEL (or pl.core_map
            # over create_tensorcore_mesh) to shard the batch axis across both
            # TensorCores.
            dimension_semantics=("parallel",),
            vmem_limit_bytes=vmem_limit,
        ),
    )(x_in, w1, b1, w2, b2, w3, b3)

    if trim_output:
        # Consumers that can read the padded (b_pad, out_p) slab directly
        # should pass trim_output=False and fuse this slice away (it is an
        # extra HBM pass over the padded output).
        return out[:B, :out_dim]
    return out


# -----------------------------------------------------------------------------
# Init + references
# -----------------------------------------------------------------------------
def init_params(key, in_dim, n_hidden_1, n_hidden_2, out_dim):
    """Deterministic init mimicking nn.Linear's uniform(-1/sqrt(fan_in), ...)."""
    ks = jax.random.split(key, 6)

    def lin(kw, kb, fan_in, fan_out):
        bound = 1.0 / jnp.sqrt(jnp.asarray(fan_in, jnp.float32))
        w = jax.random.uniform(kw, (fan_out, fan_in), jnp.float32, -bound, bound)
        b = jax.random.uniform(kb, (fan_out,), jnp.float32, -bound, bound)
        return w, b

    w1, b1 = lin(ks[0], ks[1], in_dim, n_hidden_1)
    w2, b2 = lin(ks[2], ks[3], n_hidden_1, n_hidden_2)
    w3, b3 = lin(ks[4], ks[5], n_hidden_2, out_dim)
    return {"w1": w1, "b1": b1, "w2": w2, "b2": b2, "w3": w3, "b3": b3}


def reference_forward_f32(x, p):
    h = jnp.maximum(x @ p["w1"].T + p["b1"], 0.0)
    h = jnp.maximum(h @ p["w2"].T + p["b2"], 0.0)
    return jnp.maximum(h @ p["w3"].T + p["b3"], 0.0)


def reference_forward_bf16(x, p):
    # Same mixed precision as the kernel: bf16 matmul inputs, f32 accumulation,
    # f32 bias-add + ReLU.
    bf = lambda a: a.astype(jnp.bfloat16)
    h = jnp.dot(bf(x), bf(p["w1"].T), preferred_element_type=jnp.float32)
    h = jnp.maximum(h + p["b1"], 0.0)
    h = jnp.dot(bf(h), bf(p["w2"].T), preferred_element_type=jnp.float32)
    h = jnp.maximum(h + p["b2"], 0.0)
    h = jnp.dot(bf(h), bf(p["w3"].T), preferred_element_type=jnp.float32)
    return jnp.maximum(h + p["b3"], 0.0)


if __name__ == "__main__":
    key = jax.random.PRNGKey(0)
    k_x, k_p = jax.random.split(key)

    # Small, deliberately "awkward" sizes: batch not a power of two, feature
    # dims well below 128 -> exercises padding logic and both grid paths.
    batch, in_dim, n_hidden_1, n_hidden_2, out_dim = 200, 32, 64, 32, 16
    x = jax.random.normal(k_x, (batch, in_dim), jnp.float32)
    params = init_params(k_p, in_dim, n_hidden_1, n_hidden_2, out_dim)
    packed = pack_params(params)  # one-time transpose/pad/bf16 packing

    # Default path: budget-derived tile -> single grid step at this size.
    out = jax.block_until_ready(mlp_forward(x, packed))
    assert out.shape == (batch, out_dim) and out.dtype == jnp.float32

    ref_q = reference_forward_bf16(x, params)   # same mixed precision as kernel
    ref_f = reference_forward_f32(x, params)    # pure f32 PyTorch-equivalent
    assert jnp.allclose(out, ref_q, atol=5e-3, rtol=5e-3), "mismatch vs bf16 ref"
    assert jnp.allclose(out, ref_f, atol=3e-2, rtol=3e-2), "mismatch vs f32 ref"

    # Multi-step (tiled + batch-padded) path with an explicit small tile.
    out_tiled = jax.block_until_ready(mlp_forward(x, packed, block_b=64))
    assert out_tiled.shape == (batch, out_dim)
    assert jnp.allclose(out_tiled, out, atol=1e-5, rtol=1e-5), "tiled path mismatch"

    # bf16 writeback path (halves output HBM traffic when tolerated).
    out_bf16 = jax.block_until_ready(
        mlp_forward(x, packed, out_dtype=jnp.bfloat16))
    assert out_bf16.dtype == jnp.bfloat16
    assert jnp.allclose(out_bf16.astype(jnp.float32), ref_q,
                        atol=2e-2, rtol=2e-2), "mismatch vs bf16 ref (bf16 out)"

    print("KERNEL_OK")
</pallas_src>

<mosaic_0001>
module attributes {stable_mosaic.version = 11 : i64} {
  func.func @mlp_kernel(%arg0: i32, %arg1: memref<200x32xf32, #tpu.memory_space<vmem>>, %arg2: memref<32x128xbf16, #tpu.memory_space<vmem>>, %arg3: memref<1x128xf32, #tpu.memory_space<vmem>>, %arg4: memref<128x128xbf16, #tpu.memory_space<vmem>>, %arg5: memref<1x128xf32, #tpu.memory_space<vmem>>, %arg6: memref<128x128xbf16, #tpu.memory_space<vmem>>, %arg7: memref<1x128xf32, #tpu.memory_space<vmem>>, %arg8: memref<200x128xf32, #tpu.memory_space<vmem>>) attributes {dimension_semantics = [#tpu.dimension_semantics<parallel>], iteration_bounds = array<i64: 1>, scalar_prefetch = 0 : i64, scratch_operands = 0 : i64, tpu.core_type = #tpu.core_type<tc>, window_params = [{transform_indices = @transform_0, window_bounds = array<i64: 200, 32>}, {pipeline_mode = #tpu.pipeline_mode<synchronous>, transform_indices = @transform_1, window_bounds = array<i64: 32, 128>}, {pipeline_mode = #tpu.pipeline_mode<synchronous>, transform_indices = @transform_2, window_bounds = array<i64: 1, 128>}, {pipeline_mode = #tpu.pipeline_mode<synchronous>, transform_indices = @transform_3, window_bounds = array<i64: 128, 128>}, {pipeline_mode = #tpu.pipeline_mode<synchronous>, transform_indices = @transform_4, window_bounds = array<i64: 1, 128>}, {pipeline_mode = #tpu.pipeline_mode<synchronous>, transform_indices = @transform_5, window_bounds = array<i64: 128, 128>}, {pipeline_mode = #tpu.pipeline_mode<synchronous>, transform_indices = @transform_6, window_bounds = array<i64: 1, 128>}, {transform_indices = @transform_7, window_bounds = array<i64: 200, 128>}]} {
    %c0 = arith.constant 0 : index
    %c0_0 = arith.constant 0 : index
    %0 = vector.load %arg1[%c0, %c0_0] : memref<200x32xf32, #tpu.memory_space<vmem>>, vector<200x32xf32>
    %1 = arith.truncf %0 : vector<200x32xf32> to vector<200x32xbf16>
    %c0_1 = arith.constant 0 : index
    %c0_2 = arith.constant 0 : index
    %2 = vector.load %arg2[%c0_1, %c0_2] : memref<32x128xbf16, #tpu.memory_space<vmem>>, vector<32x128xbf16>
    %cst = arith.constant dense<0.000000e+00> : vector<200x128xf32>
    %3 = tpu.matmul %1, %2, %cst {dimension_numbers = #tpu.dot_dimension_numbers<[1], [0], [0], [1], [0, 0, 1, 1], [], []>} : vector<200x32xbf16>, vector<32x128xbf16>, vector<200x128xf32> -> vector<200x128xf32>
    %c0_3 = arith.constant 0 : index
    %c0_4 = arith.constant 0 : index
    %4 = vector.load %arg3[%c0_3, %c0_4] : memref<1x128xf32, #tpu.memory_space<vmem>>, vector<1x128xf32>
    %5 = vector.broadcast %4 : vector<1x128xf32> to vector<200x128xf32>
    %6 = arith.addf %3, %5 : vector<200x128xf32>
    %cst_5 = arith.constant 0.000000e+00 : f32
    %7 = vector.broadcast %cst_5 : f32 to vector<200x128xf32>
    %8 = arith.maximumf %6, %7 : vector<200x128xf32>
    %9 = arith.truncf %8 : vector<200x128xf32> to vector<200x128xbf16>
    %c0_6 = arith.constant 0 : index
    %c0_7 = arith.constant 0 : index
    %10 = vector.load %arg4[%c0_6, %c0_7] : memref<128x128xbf16, #tpu.memory_space<vmem>>, vector<128x128xbf16>
    %cst_8 = arith.constant dense<0.000000e+00> : vector<200x128xf32>
    %11 = tpu.matmul %9, %10, %cst_8 {dimension_numbers = #tpu.dot_dimension_numbers<[1], [0], [0], [1], [0, 0, 1, 1], [], []>} : vector<200x128xbf16>, vector<128x128xbf16>, vector<200x128xf32> -> vector<200x128xf32>
    %c0_9 = arith.constant 0 : index
    %c0_10 = arith.constant 0 : index
    %12 = vector.load %arg5[%c0_9, %c0_10] : memref<1x128xf32, #tpu.memory_space<vmem>>, vector<1x128xf32>
    %13 = vector.broadcast %12 : vector<1x128xf32> to vector<200x128xf32>
    %14 = arith.addf %11, %13 : vector<200x128xf32>
    %cst_11 = arith.constant 0.000000e+00 : f32
    %15 = vector.broadcast %cst_11 : f32 to vector<200x128xf32>
    %16 = arith.maximumf %14, %15 : vector<200x128xf32>
    %17 = arith.truncf %16 : vector<200x128xf32> to vector<200x128xbf16>
    %c0_12 = arith.constant 0 : index
    %c0_13 = arith.constant 0 : index
    %18 = vector.load %arg6[%c0_12, %c0_13] : memref<128x128xbf16, #tpu.memory_space<vmem>>, vector<128x128xbf16>
    %cst_14 = arith.constant dense<0.000000e+00> : vector<200x128xf32>
    %19 = tpu.matmul %17, %18, %cst_14 {dimension_numbers = #tpu.dot_dimension_numbers<[1], [0], [0], [1], [0, 0, 1, 1], [], []>} : vector<200x128xbf16>, vector<128x128xbf16>, vector<200x128xf32> -> vector<200x128xf32>
    %c0_15 = arith.constant 0 : index
    %c0_16 = arith.constant 0 : index
    %20 = vector.load %arg7[%c0_15, %c0_16] : memref<1x128xf32, #tpu.memory_space<vmem>>, vector<1x128xf32>
    %21 = vector.broadcast %20 : vector<1x128xf32> to vector<200x128xf32>
    %22 = arith.addf %19, %21 : vector<200x128xf32>
    %cst_17 = arith.constant 0.000000e+00 : f32
    %23 = vector.broadcast %cst_17 : f32 to vector<200x128xf32>
    %24 = arith.maximumf %22, %23 : vector<200x128xf32>
    %c0_18 = arith.constant 0 : index
    %c0_19 = arith.constant 0 : index
    %25 = vector.load %arg8[%c0_18, %c0_19] : memref<200x128xf32, #tpu.memory_space<vmem>>, vector<200x128xf32>
    tpu.vector_store %arg8[%c0_18, %c0_19], %24 {strides = array<i32>} : memref<200x128xf32, #tpu.memory_space<vmem>>, vector<200x128xf32>,
    return
  }
  func.func @transform_0(%arg0: i32) -> (i32, i32) {
    %c0_i32 = arith.constant 0 : i32
    %c0_i32_0 = arith.constant 0 : i32
    return %arg0, %c0_i32 : i32, i32
  }
  func.func @transform_1(%arg0: i32) -> (i32, i32) {
    %c0_i32 = arith.constant 0 : i32
    %c0_i32_0 = arith.constant 0 : i32
    %c0_i32_1 = arith.constant 0 : i32
    return %c0_i32, %c0_i32_0 : i32, i32
  }
  func.func @transform_2(%arg0: i32) -> (i32, i32) {
    %c0_i32 = arith.constant 0 : i32
    %c0_i32_0 = arith.constant 0 : i32
    %c0_i32_1 = arith.constant 0 : i32
    return %c0_i32, %c0_i32_0 : i32, i32
  }
  func.func @transform_3(%arg0: i32) -> (i32, i32) {
    %c0_i32 = arith.constant 0 : i32
    %c0_i32_0 = arith.constant 0 : i32
    %c0_i32_1 = arith.constant 0 : i32
    return %c0_i32, %c0_i32_0 : i32, i32
  }
  func.func @transform_4(%arg0: i32) -> (i32, i32) {
    %c0_i32 = arith.constant 0 : i32
    %c0_i32_0 = arith.constant 0 : i32
    %c0_i32_1 = arith.constant 0 : i32
    return %c0_i32, %c0_i32_0 : i32, i32
  }
  func.func @transform_5(%arg0: i32) -> (i32, i32) {
    %c0_i32 = arith.constant 0 : i32
    %c0_i32_0 = arith.constant 0 : i32
    %c0_i32_1 = arith.constant 0 : i32
    return %c0_i32, %c0_i32_0 : i32, i32
  }
  func.func @transform_6(%arg0: i32) -> (i32, i32) {
    %c0_i32 = arith.constant 0 : i32
    %c0_i32_0 = arith.constant 0 : i32
    %c0_i32_1 = arith.constant 0 : i32
    return %c0_i32, %c0_i32_0 : i32, i32
  }
  func.func @transform_7(%arg0: i32) -> (i32, i32) {
    %c0_i32 = arith.constant 0 : i32
    %c0_i32_0 = arith.constant 0 : i32
    return %arg0, %c0_i32 : i32, i32
  }
}

</mosaic_0001>

<llo_original>
// kernel: tpu_custom_call.1
$region0: #{tpu_custom_call.1}
  #allocation0 [shape = 'u32[]', space=smem, size = 0x4, offset = 0x4, fixed_abs, tag = 'smem constant byte address 0x4 - core index']
  #allocation1 [shape = 'u32[144,128]{1,0:T(1,128)}', space=vmem, size = 0x12000, scoped, tag = 'internal scratch']
  %s0 = inlined_call_operand.vmem [shape: f32[200,32], index: 0, kind: input, shape index: {}]
  %s1 = inlined_call_operand.vmem [shape: bf16[32,128], index: 1, kind: input, shape index: {}]
  %s2 = inlined_call_operand.vmem [shape: f32[1,128], index: 2, kind: input, shape index: {}]
  %s3 = inlined_call_operand.vmem [shape: bf16[128,128], index: 3, kind: input, shape index: {}]
  %s4 = inlined_call_operand.vmem [shape: f32[1,128], index: 4, kind: input, shape index: {}]
  %s5 = inlined_call_operand.vmem [shape: bf16[128,128], index: 5, kind: input, shape index: {}]
  %s6 = inlined_call_operand.vmem [shape: f32[1,128], index: 6, kind: input, shape index: {}]
  %s7 = inlined_call_operand.hbm [shape: f32[200,128], index: 7, kind: output, shape index: {}]
  %s8 = sld [smem:[#allocation0]]
  $region38: #{tpu_custom_call.1} parent=0
    _
  %s10 = ssub.s32 1, %s8
  %s11 = scalar_select 0, %s10, %s8
  $region1: #{tpu_custom_call.1} parent=0
    #allocation2 [shape = 'u8[102400]{0}', space=vmem, size = 0x19000, scoped, tag = 'output window, operand 0, single buffered']
    #allocation3 [shape = 's32[1]{0}', space=sflag, size = 0x4, scoped, tag = 'scoped memory for tpu_custom_call.1']
    %12 = vsyncpa [#allocation3], 0
    // Predicated region
    $region2: #{tpu_custom_call.1} parent=1 // pred_check
      _
    $region3: #{tpu_custom_call.1} parent=1 // pred_check_branch
      %14 = sbr.rel (0) target = $region5
    $region4: #{tpu_custom_call.1} parent=1 // pred_region
      _
    $region5: #{tpu_custom_call.1} parent=1 // pred_fallthru
      _
    // Predicated region
    $region6: #{tpu_custom_call.1} parent=1 // pred_check
      _
    $region7: #{tpu_custom_call.1} parent=1 // pred_check_branch
      %16 = sbr.rel (0) target = $region9
    $region8: #{tpu_custom_call.1} parent=1 // pred_region
      _
    $region9: #{tpu_custom_call.1} parent=1 // pred_fallthru
      _
    // Predicated region
    $region10: #{tpu_custom_call.1} parent=1 // pred_check
      _
    $region11: #{tpu_custom_call.1} parent=1 // pred_check_branch
      %18 = sbr.rel (0) target = $region13
    $region12: #{tpu_custom_call.1} parent=1 // pred_region
      _
    $region13: #{tpu_custom_call.1} parent=1 // pred_fallthru
      _
    // Predicated region
    $region14: #{tpu_custom_call.1} parent=1 // pred_check
      _
    $region15: #{tpu_custom_call.1} parent=1 // pred_check_branch
      %20 = sbr.rel (0) target = $region17
    $region16: #{tpu_custom_call.1} parent=1 // pred_region
      _
    $region17: #{tpu_custom_call.1} parent=1 // pred_fallthru
      _
    // Predicated region
    $region18: #{tpu_custom_call.1} parent=1 // pred_check
      _
    $region19: #{tpu_custom_call.1} parent=1 // pred_check_branch
      %22 = sbr.rel (0) target = $region21
    $region20: #{tpu_custom_call.1} parent=1 // pred_region
      _
    $region21: #{tpu_custom_call.1} parent=1 // pred_fallthru
      _
    // Predicated region
    $region22: #{tpu_custom_call.1} parent=1 // pred_check
      _
    $region23: #{tpu_custom_call.1} parent=1 // pred_check_branch
      %24 = sbr.rel (0) target = $region25
    $region24: #{tpu_custom_call.1} parent=1 // pred_region
      _
    $region25: #{tpu_custom_call.1} parent=1 // pred_fallthru
      _
    // Predicated region
    $region26: #{tpu_custom_call.1} parent=1 // pred_check
      _
    $region27: #{tpu_custom_call.1} parent=1 // pred_check_branch
      %26 = sbr.rel (0) target = $region29
    $region28: #{tpu_custom_call.1} parent=1 // pred_region
      _
    $region29: #{tpu_custom_call.1} parent=1 // pred_fallthru
      _
    %v28 = vld [vmem:[%s0] sm:$0xff]
    %v29 = vld [vmem:[%s0 + $0x8] sm:$0xff]
    %v30 = vld [vmem:[%s0 + $0x10] sm:$0xff]
    %v31 = vld [vmem:[%s0 + $0x18] sm:$0xff]
    %v32 = vld [vmem:[%s0 + $0x20] sm:$0xff]
    %v33 = vld [vmem:[%s0 + $0x28] sm:$0xff]
    %v34 = vld [vmem:[%s0 + $0x30] sm:$0xff]
    %v35 = vld [vmem:[%s0 + $0x38] sm:$0xff]
    %v36 = vld [vmem:[%s0 + $0x40] sm:$0xff]
    %v37 = vld [vmem:[%s0 + $0x48] sm:$0xff]
    %v38 = vld [vmem:[%s0 + $0x50] sm:$0xff]
    %v39 = vld [vmem:[%s0 + $0x58] sm:$0xff]
    %v40 = vld [vmem:[%s0 + $0x60] sm:$0xff]
    %v41 = vld [vmem:[%s0 + $0x68] sm:$0xff]
    %v42 = vld [vmem:[%s0 + $0x70] sm:$0xff]
    %v43 = vld [vmem:[%s0 + $0x78] sm:$0xff]
    %v44 = vld [vmem:[%s0 + $0x80] sm:$0xff]
    %v45 = vld [vmem:[%s0 + $0x88] sm:$0xff]
    %v46 = vld [vmem:[%s0 + $0x90] sm:$0xff]
    %v47 = vld [vmem:[%s0 + $0x98] sm:$0xff]
    %v48 = vld [vmem:[%s0 + $0xa0] sm:$0xff]
    %v49 = vld [vmem:[%s0 + $0xa8] sm:$0xff]
    %v50 = vld [vmem:[%s0 + $0xb0] sm:$0xff]
    %v51 = vld [vmem:[%s0 + $0xb8] sm:$0xff]
    %v52 = vld [vmem:[%s0 + $0xc0] sm:$0xff]
    %v53 = vpack.c.bf16 %v29, %v28
    %v54 = vpack.c.bf16 %v31, %v30
    %v55 = vpack.c.bf16 %v33, %v32
    %v56 = vpack.c.bf16 %v35, %v34
    %v57 = vpack.c.bf16 %v37, %v36
    %v58 = vpack.c.bf16 %v39, %v38
    %v59 = vpack.c.bf16 %v41, %v40
    %v60 = vpack.c.bf16 %v43, %v42
    %v61 = vpack.c.bf16 %v45, %v44
    %v62 = vpack.c.bf16 %v47, %v46
    %v63 = vpack.c.bf16 %v49, %v48
    %v64 = vpack.c.bf16 %v51, %v50
    %v65 = vpack.c.bf16 %v52, %v52
    %v66 = vld [vmem:[%s1] sm:$0xf]
    %v67 = vld [vmem:[%s1 + $0x4] sm:$0xf]
    %v68 = vld [vmem:[%s1 + $0x8] sm:$0xf]
    %v69 = vld [vmem:[%s1 + $0xc] sm:$0xf]
    %v70 = vld [vmem:[%s2] sm:$0x1]
    %v72 = vlaneseq
    %v73 = vshrl.u32 %v72, 7
    %v74 = vsub.s32 0, %v73
    %v75 = vrot.slane %v70, %v74
    %v81 = vunpack.c.l.b16 %v66
    %v82 = vunpack.c.l.b16 %v67
    %v83 = vunpack.c.l.b16 %v68
    %v84 = vunpack.c.l.b16 %v69
    %v85 = vpack.c.b16 %v82, %v81
    %v86 = vpack.c.b16 %v84, %v83
    %vm89 = vcmask 261120
    %v91 = vsel %vm89, %v53, 0
    %v94 = vsel %vm89, %v54, 0
    %v97 = vsel %vm89, %v55, 0
    %v100 = vsel %vm89, %v56, 0
    %v103 = vsel %vm89, %v57, 0
    %v106 = vsel %vm89, %v58, 0
    %v109 = vsel %vm89, %v59, 0
    %v112 = vsel %vm89, %v60, 0
    %v115 = vsel %vm89, %v61, 0
    %v118 = vsel %vm89, %v62, 0
    %v121 = vsel %vm89, %v63, 0
    %v124 = vsel %vm89, %v64, 0
    %v127 = vsel %vm89, %v65, 0
    %129 = vmatprep.subr.bf16.mxu0 0
    %130 = vmatpush1.bf16.msra.mxu0 0
    %131 = vmatprep.subr.bf16.mxu0 0
    %132 = vmatpush1.bf16.msra.mxu0 0
    %133 = vmatprep.subr.bf16.mxu0 0
    %134 = vmatpush1.bf16.msra.mxu0 0
    %135 = vmatprep.subr.bf16.mxu0 0
    %136 = vmatpush1.bf16.msra.mxu0 0
    %137 = vmatprep.subr.bf16.mxu0 0
    %138 = vmatpush1.bf16.msra.mxu0 0
    %139 = vmatprep.subr.bf16.mxu0 0
    %140 = vmatpush1.bf16.msra.mxu0 0
    %141 = vmatprep.subr.bf16.mxu0 0
    %142 = vmatpush1.bf16.msra.mxu0 %v86
    %143 = vmatprep.subr.bf16.mxu0 0
    %144 = vmatpush1.bf16.msra.mxu0 %v85
    %145 = vmatprep.subr.bf16.mxu0 0
    %146 = vmatpush2.bf16.msra.mxu0 0
    %147 = vmatprep.subr.bf16.mxu0 0
    %148 = vmatpush2.bf16.msra.mxu0 0
    %149 = vmatprep.subr.bf16.mxu0 0
    %150 = vmatpush2.bf16.msra.mxu0 0
    %151 = vmatprep.subr.bf16.mxu0 0
    %152 = vmatpush2.bf16.msra.mxu0 0
    %153 = vmatprep.subr.bf16.mxu0 0
    %154 = vmatpush2.bf16.msra.mxu0 0
    %155 = vmatprep.subr.bf16.mxu0 0
    %156 = vmatpush2.bf16.msra.mxu0 0
    %157 = vmatprep.subr.bf16.mxu0 0
    %158 = vmatpush2.bf16.msra.mxu0 0
    %159 = vmatprep.subr.bf16.mxu0 0
    %160 = vmatpush2.bf16.msra.mxu0 0
    %161 = vmatprep.mubr.bf16.mxu0 0
    %162 = vmatmul.mubr.bf16.gmra.mxu0 %v91
    %v163 = vpop.f32.mrf.mxu0
    %v164 = vadd.f32 %v75, %v163
    %v165 = vpop.f32.mrf.mxu0
    %v166 = vpop.f32.mrf.mxu0
    %v167 = vadd.f32 %v75, %v166
    %v168 = vpop.f32.mrf.mxu0
    %169 = vmatprep.mubr.bf16.mxu0 0
    %170 = vmatmul.mubr.bf16.gmra.mxu0 %v94
    %v171 = vpop.f32.mrf.mxu0
    %v172 = vadd.f32 %v75, %v171
    %v173 = vpop.f32.mrf.mxu0
    %v174 = vpop.f32.mrf.mxu0
    %v175 = vadd.f32 %v75, %v174
    %v176 = vpop.f32.mrf.mxu0
    %177 = vmatprep.mubr.bf16.mxu0 0
    %178 = vmatmul.mubr.bf16.gmra.mxu0 %v97
    %v179 = vpop.f32.mrf.mxu0
    %v180 = vadd.f32 %v75, %v179
    %v181 = vpop.f32.mrf.mxu0
    %v182 = vpop.f32.mrf.mxu0
    %v183 = vadd.f32 %v75, %v182
    %v184 = vpop.f32.mrf.mxu0
    %185 = vmatprep.mubr.bf16.mxu0 0
    %186 = vmatmul.mubr.bf16.gmra.mxu0 %v100
    %v187 = vpop.f32.mrf.mxu0
    %v188 = vadd.f32 %v75, %v187
    %v189 = vpop.f32.mrf.mxu0
    %v190 = vpop.f32.mrf.mxu0
    %v191 = vadd.f32 %v75, %v190
    %v192 = vpop.f32.mrf.mxu0
    %193 = vmatprep.mubr.bf16.mxu0 0
    %194 = vmatmul.mubr.bf16.gmra.mxu0 %v103
    %v195 = vpop.f32.mrf.mxu0
    %v196 = vadd.f32 %v75, %v195
    %v197 = vpop.f32.mrf.mxu0
    %v198 = vpop.f32.mrf.mxu0
    %v199 = vadd.f32 %v75, %v198
    %v200 = vpop.f32.mrf.mxu0
    %201 = vmatprep.mubr.bf16.mxu0 0
    %202 = vmatmul.mubr.bf16.gmra.mxu0 %v106
    %v203 = vpop.f32.mrf.mxu0
    %v204 = vadd.f32 %v75, %v203
    %v205 = vpop.f32.mrf.mxu0
    %v206 = vpop.f32.mrf.mxu0
    %v207 = vadd.f32 %v75, %v206
    %v208 = vpop.f32.mrf.mxu0
    %209 = vmatprep.mubr.bf16.mxu0 0
    %210 = vmatmul.mubr.bf16.gmra.mxu0 %v109
    %v211 = vpop.f32.mrf.mxu0
    %v212 = vadd.f32 %v75, %v211
    %v213 = vpop.f32.mrf.mxu0
    %v214 = vpop.f32.mrf.mxu0
    %v215 = vadd.f32 %v75, %v214
    %v216 = vpop.f32.mrf.mxu0
    %217 = vmatprep.mubr.bf16.mxu0 0
    %218 = vmatmul.mubr.bf16.gmra.mxu0 %v112
    %v219 = vpop.f32.mrf.mxu0
    %v220 = vadd.f32 %v75, %v219
    %v221 = vpop.f32.mrf.mxu0
    %v222 = vpop.f32.mrf.mxu0
    %v223 = vadd.f32 %v75, %v222
    %v224 = vpop.f32.mrf.mxu0
    %225 = vmatprep.mubr.bf16.mxu0 0
    %226 = vmatmul.mubr.bf16.gmra.mxu0 %v115
    %v227 = vpop.f32.mrf.mxu0
    %v228 = vadd.f32 %v75, %v227
    %v229 = vpop.f32.mrf.mxu0
    %v230 = vpop.f32.mrf.mxu0
    %v231 = vadd.f32 %v75, %v230
    %v232 = vpop.f32.mrf.mxu0
    %233 = vmatprep.mubr.bf16.mxu0 0
    %234 = vmatmul.mubr.bf16.gmra.mxu0 %v118
    %v235 = vpop.f32.mrf.mxu0
    %v236 = vadd.f32 %v75, %v235
    %v237 = vpop.f32.mrf.mxu0
    %v238 = vpop.f32.mrf.mxu0
    %v239 = vadd.f32 %v75, %v238
    %v240 = vpop.f32.mrf.mxu0
    %241 = vmatprep.mubr.bf16.mxu0 0
    %242 = vmatmul.mubr.bf16.gmra.mxu0 %v121
    %v243 = vpop.f32.mrf.mxu0
    %v244 = vadd.f32 %v75, %v243
    %v245 = vpop.f32.mrf.mxu0
    %v246 = vpop.f32.mrf.mxu0
    %v247 = vadd.f32 %v75, %v246
    %v248 = vpop.f32.mrf.mxu0
    %249 = vmatprep.mubr.bf16.mxu0 0
    %250 = vmatmul.mubr.bf16.gmra.mxu0 %v124
    %v251 = vpop.f32.mrf.mxu0
    %v252 = vadd.f32 %v75, %v251
    %v253 = vpop.f32.mrf.mxu0
    %v254 = vpop.f32.mrf.mxu0
    %v255 = vadd.f32 %v75, %v254
    %v256 = vpop.f32.mrf.mxu0
    %257 = vmatprep.mubr.bf16.mxu0 0
    %258 = vmatmul.mubr.bf16.gmra.mxu0 %v127
    %v259 = vpop.f32.mrf.mxu0
    %v260 = vadd.f32 %v75, %v259
    %v261 = vpop.f32.mrf.mxu0
    %v262 = vpop.f32.mrf.mxu0
    %v263 = vpop.f32.mrf.mxu0
    %264 = vdwg.mxu0
    %v265 = vmax.f32 %v164, 0.0
    %v266 = vmax.f32 %v167, 0.0
    %v267 = vmax.f32 %v172, 0.0
    %v268 = vmax.f32 %v175, 0.0
    %v269 = vmax.f32 %v180, 0.0
    %v270 = vmax.f32 %v183, 0.0
    %v271 = vmax.f32 %v188, 0.0
    %v272 = vmax.f32 %v191, 0.0
    %v273 = vmax.f32 %v196, 0.0
    %v274 = vmax.f32 %v199, 0.0
    %v275 = vmax.f32 %v204, 0.0
    %v276 = vmax.f32 %v207, 0.0
    %v277 = vmax.f32 %v212, 0.0
    %v278 = vmax.f32 %v215, 0.0
    %v279 = vmax.f32 %v220, 0.0
    %v280 = vmax.f32 %v223, 0.0
    %v281 = vmax.f32 %v228, 0.0
    %v282 = vmax.f32 %v231, 0.0
    %v283 = vmax.f32 %v236, 0.0
    %v284 = vmax.f32 %v239, 0.0
    %v285 = vmax.f32 %v244, 0.0
    %v286 = vmax.f32 %v247, 0.0
    %v287 = vmax.f32 %v252, 0.0
    %v288 = vmax.f32 %v255, 0.0
    %v289 = vmax.f32 %v260, 0.0
    %v290 = vpack.c.bf16 %v266, %v265
    %v291 = vpack.c.bf16 %v268, %v267
    %v292 = vpack.c.bf16 %v270, %v269
    %v293 = vpack.c.bf16 %v272, %v271
    %v294 = vpack.c.bf16 %v274, %v273
    %v295 = vpack.c.bf16 %v276, %v275
    %v296 = vpack.c.bf16 %v278, %v277
    %v297 = vpack.c.bf16 %v280, %v279
    %v298 = vpack.c.bf16 %v282, %v281
    %v299 = vpack.c.bf16 %v284, %v283
    %v300 = vpack.c.bf16 %v286, %v285
    %v301 = vpack.c.bf16 %v288, %v287
    %v302 = vpack.c.bf16 %v289, %v289
    %v303 = vld [vmem:[%s3] sm:$0xf]
    %v304 = vld [vmem:[%s3 + $0x4] sm:$0xf]
    %v305 = vld [vmem:[%s3 + $0x8] sm:$0xf]
    %v306 = vld [vmem:[%s3 + $0xc] sm:$0xf]
    %v307 = vld [vmem:[%s3 + $0x10] sm:$0xf]
    %v308 = vld [vmem:[%s3 + $0x14] sm:$0xf]
    %v309 = vld [vmem:[%s3 + $0x18] sm:$0xf]
    %v310 = vld [vmem:[%s3 + $0x1c] sm:$0xf]
    %v311 = vld [vmem:[%s3 + $0x20] sm:$0xf]
    %v312 = vld [vmem:[%s3 + $0x24] sm:$0xf]
    %v313 = vld [vmem:[%s3 + $0x28] sm:$0xf]
    %v314 = vld [vmem:[%s3 + $0x2c] sm:$0xf]
    %v315 = vld [vmem:[%s3 + $0x30] sm:$0xf]
    %v316 = vld [vmem:[%s3 + $0x34] sm:$0xf]
    %v317 = vld [vmem:[%s3 + $0x38] sm:$0xf]
    %v318 = vld [vmem:[%s3 + $0x3c] sm:$0xf]
    %v319 = vld [vmem:[%s4] sm:$0x1]
    %v321 = vlaneseq
    %v322 = vshrl.u32 %v321, 7
    %v323 = vsub.s32 0, %v322
    %v324 = vrot.slane %v319, %v323
    %v342 = vunpack.c.l.b16 %v303
    %v343 = vunpack.c.l.b16 %v304
    %v344 = vunpack.c.l.b16 %v305
    %v345 = vunpack.c.l.b16 %v306
    %v346 = vunpack.c.l.b16 %v307
    %v347 = vunpack.c.l.b16 %v308
    %v348 = vunpack.c.l.b16 %v309
    %v349 = vunpack.c.l.b16 %v310
    %v350 = vunpack.c.l.b16 %v311
    %v351 = vunpack.c.l.b16 %v312
    %v352 = vunpack.c.l.b16 %v313
    %v353 = vunpack.c.l.b16 %v314
    %v354 = vunpack.c.l.b16 %v315
    %v355 = vunpack.c.l.b16 %v316
    %v356 = vunpack.c.l.b16 %v317
    %v357 = vunpack.c.l.b16 %v318
    %v358 = vpack.c.b16 %v343, %v342
    %v359 = vpack.c.b16 %v345, %v344
    %v360 = vpack.c.b16 %v347, %v346
    %v361 = vpack.c.b16 %v349, %v348
    %v362 = vpack.c.b16 %v351, %v350
    %v363 = vpack.c.b16 %v353, %v352
    %v364 = vpack.c.b16 %v355, %v354
    %v365 = vpack.c.b16 %v357, %v356
    %374 = vmatprep.subr.bf16.mxu0 0
    %375 = vmatpush1.bf16.msra.mxu0 %v365
    %376 = vmatprep.subr.bf16.mxu0 0
    %377 = vmatpush1.bf16.msra.mxu0 %v364
    %378 = vmatprep.subr.bf16.mxu0 0
    %379 = vmatpush1.bf16.msra.mxu0 %v363
    %380 = vmatprep.subr.bf16.mxu0 0
    %381 = vmatpush1.bf16.msra.mxu0 %v362
    %382 = vmatprep.subr.bf16.mxu0 0
    %383 = vmatpush1.bf16.msra.mxu0 %v361
    %384 = vmatprep.subr.bf16.mxu0 0
    %385 = vmatpush1.bf16.msra.mxu0 %v360
    %386 = vmatprep.subr.bf16.mxu0 0
    %387 = vmatpush1.bf16.msra.mxu0 %v359
    %388 = vmatprep.subr.bf16.mxu0 0
    %389 = vmatpush1.bf16.msra.mxu0 %v358
    %390 = vmatprep.subr.bf16.mxu0 0
    %391 = vmatpush2.bf16.msra.mxu0 0
    %392 = vmatprep.subr.bf16.mxu0 0
    %393 = vmatpush2.bf16.msra.mxu0 0
    %394 = vmatprep.subr.bf16.mxu0 0
    %395 = vmatpush2.bf16.msra.mxu0 0
    %396 = vmatprep.subr.bf16.mxu0 0
    %397 = vmatpush2.bf16.msra.mxu0 0
    %398 = vmatprep.subr.bf16.mxu0 0
    %399 = vmatpush2.bf16.msra.mxu0 0
    %400 = vmatprep.subr.bf16.mxu0 0
    %401 = vmatpush2.bf16.msra.mxu0 0
    %402 = vmatprep.subr.bf16.mxu0 0
    %403 = vmatpush2.bf16.msra.mxu0 0
    %404 = vmatprep.subr.bf16.mxu0 0
    %405 = vmatpush2.bf16.msra.mxu0 0
    %406 = vmatprep.mubr.bf16.mxu0 0
    %407 = vmatmul.mubr.bf16.gmra.mxu0 %v290
    %v408 = vpop.f32.mrf.mxu0
    %v409 = vadd.f32 %v324, %v408
    %v410 = vpop.f32.mrf.mxu0
    %v411 = vpop.f32.mrf.mxu0
    %v412 = vadd.f32 %v324, %v411
    %v413 = vpop.f32.mrf.mxu0
    %414 = vmatprep.mubr.bf16.mxu0 0
    %415 = vmatmul.mubr.bf16.gmra.mxu0 %v291
    %v416 = vpop.f32.mrf.mxu0
    %v417 = vadd.f32 %v324, %v416
    %v418 = vpop.f32.mrf.mxu0
    %v419 = vpop.f32.mrf.mxu0
    %v420 = vadd.f32 %v324, %v419
    %v421 = vpop.f32.mrf.mxu0
    %422 = vmatprep.mubr.bf16.mxu0 0
    %423 = vmatmul.mubr.bf16.gmra.mxu0 %v292
    %v424 = vpop.f32.mrf.mxu0
    %v425 = vadd.f32 %v324, %v424
    %v426 = vpop.f32.mrf.mxu0
    %v427 = vpop.f32.mrf.mxu0
    %v428 = vadd.f32 %v324, %v427
    %v429 = vpop.f32.mrf.mxu0
    %430 = vmatprep.mubr.bf16.mxu0 0
    %431 = vmatmul.mubr.bf16.gmra.mxu0 %v293
    %v432 = vpop.f32.mrf.mxu0
    %v433 = vadd.f32 %v324, %v432
    %v434 = vpop.f32.mrf.mxu0
    %v435 = vpop.f32.mrf.mxu0
    %v436 = vadd.f32 %v324, %v435
    %v437 = vpop.f32.mrf.mxu0
    %438 = vmatprep.mubr.bf16.mxu0 0
    %439 = vmatmul.mubr.bf16.gmra.mxu0 %v294
    %v440 = vpop.f32.mrf.mxu0
    %v441 = vadd.f32 %v324, %v440
    %v442 = vpop.f32.mrf.mxu0
    %v443 = vpop.f32.mrf.mxu0
    %v444 = vadd.f32 %v324, %v443
    %v445 = vpop.f32.mrf.mxu0
    %446 = vmatprep.mubr.bf16.mxu0 0
    %447 = vmatmul.mubr.bf16.gmra.mxu0 %v295
    %v448 = vpop.f32.mrf.mxu0
    %v449 = vadd.f32 %v324, %v448
    %v450 = vpop.f32.mrf.mxu0
    %v451 = vpop.f32.mrf.mxu0
    %v452 = vadd.f32 %v324, %v451
    %v453 = vpop.f32.mrf.mxu0
    %454 = vmatprep.mubr.bf16.mxu0 0
    %455 = vmatmul.mubr.bf16.gmra.mxu0 %v296
    %v456 = vpop.f32.mrf.mxu0
    %v457 = vadd.f32 %v324, %v456
    %v458 = vpop.f32.mrf.mxu0
    %v459 = vpop.f32.mrf.mxu0
    %v460 = vadd.f32 %v324, %v459
    %v461 = vpop.f32.mrf.mxu0
    %462 = vmatprep.mubr.bf16.mxu0 0
    %463 = vmatmul.mubr.bf16.gmra.mxu0 %v297
    %v464 = vpop.f32.mrf.mxu0
    %v465 = vadd.f32 %v324, %v464
    %v466 = vpop.f32.mrf.mxu0
    %v467 = vpop.f32.mrf.mxu0
    %v468 = vadd.f32 %v324, %v467
    %v469 = vpop.f32.mrf.mxu0
    %470 = vmatprep.mubr.bf16.mxu0 0
    %471 = vmatmul.mubr.bf16.gmra.mxu0 %v298
    %v472 = vpop.f32.mrf.mxu0
    %v473 = vadd.f32 %v324, %v472
    %v474 = vpop.f32.mrf.mxu0
    %v475 = vpop.f32.mrf.mxu0
    %v476 = vadd.f32 %v324, %v475
    %v477 = vpop.f32.mrf.mxu0
    %478 = vmatprep.mubr.bf16.mxu0 0
    %479 = vmatmul.mubr.bf16.gmra.mxu0 %v299
    %v480 = vpop.f32.mrf.mxu0
    %v481 = vadd.f32 %v324, %v480
    %v482 = vpop.f32.mrf.mxu0
    %v483 = vpop.f32.mrf.mxu0
    %v484 = vadd.f32 %v324, %v483
    %v485 = vpop.f32.mrf.mxu0
    %486 = vmatprep.mubr.bf16.mxu0 0
    %487 = vmatmul.mubr.bf16.gmra.mxu0 %v300
    %v488 = vpop.f32.mrf.mxu0
    %v489 = vadd.f32 %v324, %v488
    %v490 = vpop.f32.mrf.mxu0
    %v491 = vpop.f32.mrf.mxu0
    %v492 = vadd.f32 %v324, %v491
    %v493 = vpop.f32.mrf.mxu0
    %494 = vmatprep.mubr.bf16.mxu0 0
    %495 = vmatmul.mubr.bf16.gmra.mxu0 %v301
    %v496 = vpop.f32.mrf.mxu0
    %v497 = vadd.f32 %v324, %v496
    %v498 = vpop.f32.mrf.mxu0
    %v499 = vpop.f32.mrf.mxu0
    %v500 = vadd.f32 %v324, %v499
    %v501 = vpop.f32.mrf.mxu0
    %502 = vmatprep.mubr.bf16.mxu0 0
    %503 = vmatmul.mubr.bf16.gmra.mxu0 %v302
    %v504 = vpop.f32.mrf.mxu0
    %v505 = vadd.f32 %v324, %v504
    %v506 = vpop.f32.mrf.mxu0
    %v507 = vpop.f32.mrf.mxu0
    %v508 = vpop.f32.mrf.mxu0
    %509 = vdwg.mxu0
    %v510 = vmax.f32 %v409, 0.0
    %v511 = vmax.f32 %v412, 0.0
    %v512 = vmax.f32 %v417, 0.0
    %v513 = vmax.f32 %v420, 0.0
    %v514 = vmax.f32 %v425, 0.0
    %v515 = vmax.f32 %v428, 0.0
    %v516 = vmax.f32 %v433, 0.0
    %v517 = vmax.f32 %v436, 0.0
    %v518 = vmax.f32 %v441, 0.0
    %v519 = vmax.f32 %v444, 0.0
    %v520 = vmax.f32 %v449, 0.0
    %v521 = vmax.f32 %v452, 0.0
    %v522 = vmax.f32 %v457, 0.0
    %v523 = vmax.f32 %v460, 0.0
    %v524 = vmax.f32 %v465, 0.0
    %v525 = vmax.f32 %v468, 0.0
    %v526 = vmax.f32 %v473, 0.0
    %v527 = vmax.f32 %v476, 0.0
    %v528 = vmax.f32 %v481, 0.0
    %v529 = vmax.f32 %v484, 0.0
    %v530 = vmax.f32 %v489, 0.0
    %v531 = vmax.f32 %v492, 0.0
    %v532 = vmax.f32 %v497, 0.0
    %v533 = vmax.f32 %v500, 0.0
    %v534 = vmax.f32 %v505, 0.0
    %v535 = vpack.c.bf16 %v511, %v510
    %v536 = vpack.c.bf16 %v513, %v512
    %v537 = vpack.c.bf16 %v515, %v514
    %v538 = vpack.c.bf16 %v517, %v516
    %v539 = vpack.c.bf16 %v519, %v518
    %v540 = vpack.c.bf16 %v521, %v520
    %v541 = vpack.c.bf16 %v523, %v522
    %v542 = vpack.c.bf16 %v525, %v524
    %v543 = vpack.c.bf16 %v527, %v526
    %v544 = vpack.c.bf16 %v529, %v528
    %v545 = vpack.c.bf16 %v531, %v530
    %v546 = vpack.c.bf16 %v533, %v532
    %v547 = vpack.c.bf16 %v534, %v534
    %v548 = vld [vmem:[%s5] sm:$0xf]
    %v549 = vld [vmem:[%s5 + $0x4] sm:$0xf]
    %v550 = vld [vmem:[%s5 + $0x8] sm:$0xf]
    %v551 = vld [vmem:[%s5 + $0xc] sm:$0xf]
    %v552 = vld [vmem:[%s5 + $0x10] sm:$0xf]
    %v553 = vld [vmem:[%s5 + $0x14] sm:$0xf]
    %v554 = vld [vmem:[%s5 + $0x18] sm:$0xf]
    %v555 = vld [vmem:[%s5 + $0x1c] sm:$0xf]
    %v556 = vld [vmem:[%s5 + $0x20] sm:$0xf]
    %v557 = vld [vmem:[%s5 + $0x24] sm:$0xf]
    %v558 = vld [vmem:[%s5 + $0x28] sm:$0xf]
    %v559 = vld [vmem:[%s5 + $0x2c] sm:$0xf]
    %v560 = vld [vmem:[%s5 + $0x30] sm:$0xf]
    %v561 = vld [vmem:[%s5 + $0x34] sm:$0xf]
    %v562 = vld [vmem:[%s5 + $0x38] sm:$0xf]
    %v563 = vld [vmem:[%s5 + $0x3c] sm:$0xf]
    %v564 = vld [vmem:[%s6] sm:$0x1]
    %v566 = vlaneseq
    %v567 = vshrl.u32 %v566, 7
    %v568 = vsub.s32 0, %v567
    %v569 = vrot.slane %v564, %v568
    %v587 = vunpack.c.l.b16 %v548
    %v588 = vunpack.c.l.b16 %v549
    %v589 = vunpack.c.l.b16 %v550
    %v590 = vunpack.c.l.b16 %v551
    %v591 = vunpack.c.l.b16 %v552
    %v592 = vunpack.c.l.b16 %v553
    %v593 = vunpack.c.l.b16 %v554
    %v594 = vunpack.c.l.b16 %v555
    %v595 = vunpack.c.l.b16 %v556
    %v596 = vunpack.c.l.b16 %v557
    %v597 = vunpack.c.l.b16 %v558
    %v598 = vunpack.c.l.b16 %v559
    %v599 = vunpack.c.l.b16 %v560
    %v600 = vunpack.c.l.b16 %v561
    %v601 = vunpack.c.l.b16 %v562
    %v602 = vunpack.c.l.b16 %v563
    %v603 = vpack.c.b16 %v588, %v587
    %v604 = vpack.c.b16 %v590, %v589
    %v605 = vpack.c.b16 %v592, %v591
    %v606 = vpack.c.b16 %v594, %v593
    %v607 = vpack.c.b16 %v596, %v595
    %v608 = vpack.c.b16 %v598, %v597
    %v609 = vpack.c.b16 %v600, %v599
    %v610 = vpack.c.b16 %v602, %v601
    %619 = vmatprep.subr.bf16.mxu0 0
    %620 = vmatpush1.bf16.msra.mxu0 %v610
    %621 = vmatprep.subr.bf16.mxu0 0
    %622 = vmatpush1.bf16.msra.mxu0 %v609
    %623 = vmatprep.subr.bf16.mxu0 0
    %624 = vmatpush1.bf16.msra.mxu0 %v608
    %625 = vmatprep.subr.bf16.mxu0 0
    %626 = vmatpush1.bf16.msra.mxu0 %v607
    %627 = vmatprep.subr.bf16.mxu0 0
    %628 = vmatpush1.bf16.msra.mxu0 %v606
    %629 = vmatprep.subr.bf16.mxu0 0
    %630 = vmatpush1.bf16.msra.mxu0 %v605
    %631 = vmatprep.subr.bf16.mxu0 0
    %632 = vmatpush1.bf16.msra.mxu0 %v604
    %633 = vmatprep.subr.bf16.mxu0 0
    %634 = vmatpush1.bf16.msra.mxu0 %v603
    %635 = vmatprep.subr.bf16.mxu0 0
    %636 = vmatpush2.bf16.msra.mxu0 0
    %637 = vmatprep.subr.bf16.mxu0 0
    %638 = vmatpush2.bf16.msra.mxu0 0
    %639 = vmatprep.subr.bf16.mxu0 0
    %640 = vmatpush2.bf16.msra.mxu0 0
    %641 = vmatprep.subr.bf16.mxu0 0
    %642 = vmatpush2.bf16.msra.mxu0 0
    %643 = vmatprep.subr.bf16.mxu0 0
    %644 = vmatpush2.bf16.msra.mxu0 0
    %645 = vmatprep.subr.bf16.mxu0 0
    %646 = vmatpush2.bf16.msra.mxu0 0
    %647 = vmatprep.subr.bf16.mxu0 0
    %648 = vmatpush2.bf16.msra.mxu0 0
    %649 = vmatprep.subr.bf16.mxu0 0
    %650 = vmatpush2.bf16.msra.mxu0 0
    %651 = vmatprep.mubr.bf16.mxu0 0
    %652 = vmatmul.mubr.bf16.gmra.mxu0 %v535
    %v653 = vpop.f32.mrf.mxu0
    %v654 = vadd.f32 %v569, %v653
    %v655 = vpop.f32.mrf.mxu0
    %v656 = vpop.f32.mrf.mxu0
    %v657 = vadd.f32 %v569, %v656
    %v658 = vpop.f32.mrf.mxu0
    %659 = vmatprep.mubr.bf16.mxu0 0
    %660 = vmatmul.mubr.bf16.gmra.mxu0 %v536
    %v661 = vpop.f32.mrf.mxu0
    %v662 = vadd.f32 %v569, %v661
    %v663 = vpop.f32.mrf.mxu0
    %v664 = vpop.f32.mrf.mxu0
    %v665 = vadd.f32 %v569, %v664
    %v666 = vpop.f32.mrf.mxu0
    %667 = vmatprep.mubr.bf16.mxu0 0
    %668 = vmatmul.mubr.bf16.gmra.mxu0 %v537
    %v669 = vpop.f32.mrf.mxu0
    %v670 = vadd.f32 %v569, %v669
    %v671 = vpop.f32.mrf.mxu0
    %v672 = vpop.f32.mrf.mxu0
    %v673 = vadd.f32 %v569, %v672
    %v674 = vpop.f32.mrf.mxu0
    %675 = vmatprep.mubr.bf16.mxu0 0
    %676 = vmatmul.mubr.bf16.gmra.mxu0 %v538
    %v677 = vpop.f32.mrf.mxu0
    %v678 = vadd.f32 %v569, %v677
    %v679 = vpop.f32.mrf.mxu0
    %v680 = vpop.f32.mrf.mxu0
    %v681 = vadd.f32 %v569, %v680
    %v682 = vpop.f32.mrf.mxu0
    %683 = vmatprep.mubr.bf16.mxu0 0
    %684 = vmatmul.mubr.bf16.gmra.mxu0 %v539
    %v685 = vpop.f32.mrf.mxu0
    %v686 = vadd.f32 %v569, %v685
    %v687 = vpop.f32.mrf.mxu0
    %v688 = vpop.f32.mrf.mxu0
    %v689 = vadd.f32 %v569, %v688
    %v690 = vpop.f32.mrf.mxu0
    %691 = vmatprep.mubr.bf16.mxu0 0
    %692 = vmatmul.mubr.bf16.gmra.mxu0 %v540
    %v693 = vpop.f32.mrf.mxu0
    %v694 = vadd.f32 %v569, %v693
    %v695 = vpop.f32.mrf.mxu0
    %v696 = vpop.f32.mrf.mxu0
    %v697 = vadd.f32 %v569, %v696
    %v698 = vpop.f32.mrf.mxu0
    %699 = vmatprep.mubr.bf16.mxu0 0
    %700 = vmatmul.mubr.bf16.gmra.mxu0 %v541
    %v701 = vpop.f32.mrf.mxu0
    %v702 = vadd.f32 %v569, %v701
    %v703 = vpop.f32.mrf.mxu0
    %v704 = vpop.f32.mrf.mxu0
    %v705 = vadd.f32 %v569, %v704
    %v706 = vpop.f32.mrf.mxu0
    %707 = vmatprep.mubr.bf16.mxu0 0
    %708 = vmatmul.mubr.bf16.gmra.mxu0 %v542
    %v709 = vpop.f32.mrf.mxu0
    %v710 = vadd.f32 %v569, %v709
    %v711 = vpop.f32.mrf.mxu0
    %v712 = vpop.f32.mrf.mxu0
    %v713 = vadd.f32 %v569, %v712
    %v714 = vpop.f32.mrf.mxu0
    %715 = vmatprep.mubr.bf16.mxu0 0
    %716 = vmatmul.mubr.bf16.gmra.mxu0 %v543
    %v717 = vpop.f32.mrf.mxu0
    %v718 = vadd.f32 %v569, %v717
    %v719 = vpop.f32.mrf.mxu0
    %v720 = vpop.f32.mrf.mxu0
    %v721 = vadd.f32 %v569, %v720
    %v722 = vpop.f32.mrf.mxu0
    %723 = vmatprep.mubr.bf16.mxu0 0
    %724 = vmatmul.mubr.bf16.gmra.mxu0 %v544
    %v725 = vpop.f32.mrf.mxu0
    %v726 = vadd.f32 %v569, %v725
    %v727 = vpop.f32.mrf.mxu0
    %v728 = vpop.f32.mrf.mxu0
    %v729 = vadd.f32 %v569, %v728
    %v730 = vpop.f32.mrf.mxu0
    %731 = vmatprep.mubr.bf16.mxu0 0
    %732 = vmatmul.mubr.bf16.gmra.mxu0 %v545
    %v733 = vpop.f32.mrf.mxu0
    %v734 = vadd.f32 %v569, %v733
    %v735 = vpop.f32.mrf.mxu0
    %v736 = vpop.f32.mrf.mxu0
    %v737 = vadd.f32 %v569, %v736
    %v738 = vpop.f32.mrf.mxu0
    %739 = vmatprep.mubr.bf16.mxu0 0
    %740 = vmatmul.mubr.bf16.gmra.mxu0 %v546
    %v741 = vpop.f32.mrf.mxu0
    %v742 = vadd.f32 %v569, %v741
    %v743 = vpop.f32.mrf.mxu0
    %v744 = vpop.f32.mrf.mxu0
    %v745 = vadd.f32 %v569, %v744
    %v746 = vpop.f32.mrf.mxu0
    %747 = vmatprep.mubr.bf16.mxu0 0
    %748 = vmatmul.mubr.bf16.gmra.mxu0 %v547
    %v749 = vpop.f32.mrf.mxu0
    %v750 = vadd.f32 %v569, %v749
    %v751 = vpop.f32.mrf.mxu0
    %v752 = vpop.f32.mrf.mxu0
    %v753 = vpop.f32.mrf.mxu0
    %754 = vdwg.mxu0
    %v755 = vmax.f32 %v654, 0.0
    %v756 = vmax.f32 %v657, 0.0
    %v757 = vmax.f32 %v662, 0.0
    %v758 = vmax.f32 %v665, 0.0
    %v759 = vmax.f32 %v670, 0.0
    %v760 = vmax.f32 %v673, 0.0
    %v761 = vmax.f32 %v678, 0.0
    %v762 = vmax.f32 %v681, 0.0
    %v763 = vmax.f32 %v686, 0.0
    %v764 = vmax.f32 %v689, 0.0
    %v765 = vmax.f32 %v694, 0.0
    %v766 = vmax.f32 %v697, 0.0
    %v767 = vmax.f32 %v702, 0.0
    %v768 = vmax.f32 %v705, 0.0
    %v769 = vmax.f32 %v710, 0.0
    %v770 = vmax.f32 %v713, 0.0
    %v771 = vmax.f32 %v718, 0.0
    %v772 = vmax.f32 %v721, 0.0
    %v773 = vmax.f32 %v726, 0.0
    %v774 = vmax.f32 %v729, 0.0
    %v775 = vmax.f32 %v734, 0.0
    %v776 = vmax.f32 %v737, 0.0
    %v777 = vmax.f32 %v742, 0.0
    %v778 = vmax.f32 %v745, 0.0
    %v779 = vmax.f32 %v750, 0.0
    %780 = vst [vmem:[#allocation2] sm:$0xff] %v755
    %781 = vst [vmem:[#allocation2 + $0x8] sm:$0xff] %v756
    %782 = vst [vmem:[#allocation2 + $0x10] sm:$0xff] %v757
    %783 = vst [vmem:[#allocation2 + $0x18] sm:$0xff] %v758
    %784 = vst [vmem:[#allocation2 + $0x20] sm:$0xff] %v759
    %785 = vst [vmem:[#allocation2 + $0x28] sm:$0xff] %v760
    %786 = vst [vmem:[#allocation2 + $0x30] sm:$0xff] %v761
    %787 = vst [vmem:[#allocation2 + $0x38] sm:$0xff] %v762
    %788 = vst [vmem:[#allocation2 + $0x40] sm:$0xff] %v763
    %789 = vst [vmem:[#allocation2 + $0x48] sm:$0xff] %v764
    %790 = vst [vmem:[#allocation2 + $0x50] sm:$0xff] %v765
    %791 = vst [vmem:[#allocation2 + $0x58] sm:$0xff] %v766
    %792 = vst [vmem:[#allocation2 + $0x60] sm:$0xff] %v767
    %793 = vst [vmem:[#allocation2 + $0x68] sm:$0xff] %v768
    %794 = vst [vmem:[#allocation2 + $0x70] sm:$0xff] %v769
    %795 = vst [vmem:[#allocation2 + $0x78] sm:$0xff] %v770
    %796 = vst [vmem:[#allocation2 + $0x80] sm:$0xff] %v771
    %797 = vst [vmem:[#allocation2 + $0x88] sm:$0xff] %v772
    %798 = vst [vmem:[#allocation2 + $0x90] sm:$0xff] %v773
    %799 = vst [vmem:[#allocation2 + $0x98] sm:$0xff] %v774
    %800 = vst [vmem:[#allocation2 + $0xa0] sm:$0xff] %v775
    %801 = vst [vmem:[#allocation2 + $0xa8] sm:$0xff] %v776
    %802 = vst [vmem:[#allocation2 + $0xb0] sm:$0xff] %v777
    %803 = vst [vmem:[#allocation2 + $0xb8] sm:$0xff] %v778
    %804 = vst [vmem:[#allocation2 + $0xc0] sm:$0xff] %v779
    // Predicated region
    $region30: #{tpu_custom_call.1} parent=1 // pred_check
      _
    $region31: #{tpu_custom_call.1} parent=1 // pred_check_branch
      %806 = sbr.rel (0) target = $region33
    $region32: #{tpu_custom_call.1} parent=1 // pred_region
      %s808 = ssub.s32 3200, 3200
      %809 = vsyncadd [#allocation3], %s808
      %s810 = sshll.u32 [#allocation2], 4
      %s811 = int_to_ptr.vmem [resolvable:$true] %s810
      %816 = dma.vmem_to_hbm [thread:$0]  %s811, 3200, %s7, [#allocation3], 128, 128, 8
    $region33: #{tpu_custom_call.1} parent=1 // pred_fallthru
      _
    // Predicated region
    $region34: #{tpu_custom_call.1} parent=1 // pred_check
      _
    $region35: #{tpu_custom_call.1} parent=1 // pred_check_branch
      %818 = sbr.rel (0) target = $region37
    $region36: #{tpu_custom_call.1} parent=1 // pred_region
      %819 = dma.done [#allocation3], 3200
    $region37: #{tpu_custom_call.1} parent=1 // pred_fallthru
      _
    %820 = vsyncpa [#allocation3], 1

</llo_original>
